<compile_context>
chip_gen: v5e
topology: v5e:2x2
jax: 0.10.0
libtpu: 0.0.40
codegen_flags: <defaults>
</compile_context>

<pallas_src>
import jax
import jax.numpy as jnp
from jax.experimental import pallas as pl
from jax.experimental.pallas import tpu as pltpu


# ---------------------------------------------------------------------------
# Static model configuration (small shapes consistent with the module).
# ---------------------------------------------------------------------------
HIDDEN = 32          # hidden_size
BATCH = 2            # graphs per batch
NODES = 8            # nodes per graph (stand-in graphs)
SHAPE_FEAT = 4       # per-node "shape" feature width (stand-in)
KERNEL_FEAT = 2      # per-node "kernel" feature width (stand-in)
N_OP_TYPES = 16      # op-type vocabulary size (stand-in)
EXT_FEAT = 0         # ext_feat_size = 0, activ = None


def _ru8(x):
    return (x + 7) // 8 * 8


# Row layout of the packed parameter slab [SLAB_ROWS, HIDDEN].  The embed
# section (rows 0..EMB_K-1) is laid out so it matches, row-for-lane, the fused
# embed operand assembled in the kernel -> a single MXU matmul does the whole
# embedding.
ROW_OP = 0                                   # op_table      [16, H]
ROW_SHP = ROW_OP + N_OP_TYPES                # shape_proj    [4,  H]   (row 16)
ROW_KER = ROW_SHP + SHAPE_FEAT               # kernel_proj   [2,  H]   (row 20)
ROW_BIAS = ROW_KER + KERNEL_FEAT             # all-ones bias [1,  H]   (row 22)
EMB_K = ROW_BIAS + 1                         # fused embed K = 23
ROW_ENC = _ru8(EMB_K)                        # enc_w               [H, H] (24)
ROW_A1 = ROW_ENC + HIDDEN                    # folded W1@W2        [H, H] (56)
ROW_C1 = ROW_A1 + HIDDEN                     # folded b1@W2+b2     [1, H] (88)
ROW_A2 = ROW_C1 + 1                          # folded (W3@W4@Wr)^T [1, H] (89)
ROW_C2 = ROW_A2 + 1                          # folded scalar bias  [1, H] (90)
SLAB_ROWS = _ru8(ROW_C2 + 1)                 # = 96


# ---------------------------------------------------------------------------
# Fused Pallas kernel: embed -> encode -> aggregate -> folded post_proj + head
# ---------------------------------------------------------------------------
def cg_regressor_fused_kernel(reg_inds_ref,    # [BN, 1]  int32 (VMEM)
                              w_inds_ref,      # [BN, 1]  int32 (VMEM)
                              reg_shapes_ref,  # [BN, 4]  f32   (VMEM)
                              w_shapes_ref,    # [BN, 4]  f32   (VMEM)
                              w_kernels_ref,   # [BN, 2]  f32   (VMEM)
                              w_bias_ref,      # [BN, 1]  f32   (VMEM)
                              adj_bd_ref,      # [BN, BN] f32   (VMEM, block-diag)
                              last_idx_ref,    # [B]      int32 (SMEM)
                              params_ref,      # [SLAB_ROWS, H] f32 (VMEM)
                              o_ref,           # [B, 1]   f32   (VMEM)
                              fused_ref):      # [BN, EMB_K] f32 VMEM scratch
    BN = adj_bd_ref.shape[0]
    B = o_ref.shape[0]
    H = HIDDEN
    N = NODES

    # --- embed layer: assemble one lane-packed operand -> ONE MXU push ------
    t_iota = jax.lax.broadcasted_iota(jnp.int32, (BN, N_OP_TYPES), 1)
    one_hot = ((reg_inds_ref[...] == t_iota).astype(jnp.float32)
               + (w_inds_ref[...] == t_iota).astype(jnp.float32))   # [BN, 16]
    # static lane-slice stores (masked vst) into the fused operand scratch;
    # every lane [0, EMB_K) is written before the load below.
    fused_ref[:, ROW_OP:ROW_OP + N_OP_TYPES] = one_hot
    fused_ref[:, ROW_SHP:ROW_SHP + SHAPE_FEAT] = (reg_shapes_ref[...]
                                                  + w_shapes_ref[...])
    fused_ref[:, ROW_KER:ROW_KER + KERNEL_FEAT] = w_kernels_ref[...]
    fused_ref[:, ROW_BIAS:ROW_BIAS + 1] = w_bias_ref[...]

    emb = jnp.dot(fused_ref[...], params_ref[ROW_OP:ROW_OP + EMB_K, :],
                  preferred_element_type=jnp.float32)                # [BN, H]

    # --- encoder: one message-passing step over block-diagonal adjacency ----
    msg = jnp.dot(adj_bd_ref[...], emb,
                  preferred_element_type=jnp.float32)                # [BN, H]
    enc = jnp.tanh(emb + jnp.dot(msg, params_ref[ROW_ENC:ROW_ENC + H, :],
                                 preferred_element_type=jnp.float32))

    # --- aggregator: masked mean per graph as one [B,BN] @ [BN,H] matmul ----
    row1 = jax.lax.broadcasted_iota(jnp.int32, (B, 1), 0)            # [B, 1]
    last_vec = jnp.zeros((B, 1), jnp.int32)
    for b in range(B):                       # B scalar SMEM reads -> vector
        last_vec = jnp.where(row1 == b, last_idx_ref[b], last_vec)
    last_vec = jnp.minimum(last_vec, N - 1)                          # clamp
    cnt = jnp.maximum(last_vec.astype(jnp.float32) + 1.0, 1.0)       # [B, 1]
    inv_cnt = 1.0 / cnt

    col = jax.lax.broadcasted_iota(jnp.int32, (B, BN), 1)            # [B, BN]
    lo = N * jax.lax.broadcasted_iota(jnp.int32, (B, BN), 0)         # b*N rows
    valid = jnp.logical_and(col >= lo, (col - lo) <= last_vec)
    mmask = valid.astype(jnp.float32) * inv_cnt                      # [B, BN]
    ge = jnp.dot(mmask, enc, preferred_element_type=jnp.float32)     # [B, H]

    # --- folded head: (Lin;Lin) -> ReLU -> (Lin;Lin;regressor) --------------
    a1 = params_ref[ROW_A1:ROW_A1 + H, :]                            # [H, H]
    c1 = params_ref[ROW_C1:ROW_C1 + 1, :]                            # [1, H]
    a2 = params_ref[ROW_A2:ROW_A2 + 1, :]                            # [1, H]
    c2 = params_ref[ROW_C2:ROW_C2 + 1, :][:, 0:1]                    # [1, 1]
    h = jnp.maximum(jnp.dot(ge, a1, preferred_element_type=jnp.float32) + c1,
                    0.0)                                             # [B, H]
    # activ is None, ext_feat is None -> straight to the (folded) regressor.
    out = jnp.sum(h * a2, axis=-1, keepdims=True) + c2               # [B, 1]
    o_ref[...] = out.astype(o_ref.dtype)


@jax.jit
def cg_regressor_forward(inputs, packed_params):
    """Fused CGRegressor forward: raw node features -> [B, 1] regression."""
    (reg_inds, reg_shapes, w_inds, w_shapes, w_kernels, w_bias,
     edge_adj, batch_last_node_idx) = inputs
    B, N = reg_inds.shape
    BN = B * N

    # Reshape-only prep (leading-dim collapses are free bitcasts); no
    # concatenated HBM intermediates -- operand packing happens in-kernel.
    ri = reg_inds.reshape(BN, 1).astype(jnp.int32)
    wi = w_inds.reshape(BN, 1).astype(jnp.int32)
    rs = reg_shapes.reshape(BN, SHAPE_FEAT).astype(jnp.float32)
    ws = w_shapes.reshape(BN, SHAPE_FEAT).astype(jnp.float32)
    wk = w_kernels.reshape(BN, KERNEL_FEAT).astype(jnp.float32)
    wb = w_bias.reshape(BN, 1).astype(jnp.float32)
    last = batch_last_node_idx.reshape(B).astype(jnp.int32)

    # Block-diagonal adjacency [BN, BN] so encoder + aggregator run as 3
    # batched matmuls (O(1) MXU passes) instead of a per-graph loop.
    eye = jnp.eye(B, dtype=jnp.float32)
    adj = edge_adj.astype(jnp.float32)
    adj_bd = (eye[:, None, :, None] * adj[:, :, None, :]).reshape(BN, BN)

    vmem = pl.BlockSpec(memory_space=pltpu.MemorySpace.VMEM)
    smem = pl.BlockSpec(memory_space=pltpu.MemorySpace.SMEM)
    return pl.pallas_call(
        cg_regressor_fused_kernel,
        out_shape=jax.ShapeDtypeStruct((B, 1), jnp.float32),
        in_specs=[vmem, vmem, vmem, vmem, vmem, vmem, vmem, smem, vmem],
        out_specs=vmem,
        scratch_shapes=[pltpu.VMEM((BN, EMB_K), jnp.float32)],
    )(ri, wi, rs, ws, wk, wb, adj_bd, last, packed_params)


# ---------------------------------------------------------------------------
# Parameter init (torch.nn.Linear-style uniform) + fold/pack into one slab.
# ---------------------------------------------------------------------------
def _init_linear(key, fan_in, fan_out):
    kw, kb = jax.random.split(key)
    bound = 1.0 / (fan_in ** 0.5)
    w = jax.random.uniform(kw, (fan_in, fan_out), jnp.float32, -bound, bound)
    b = jax.random.uniform(kb, (1, fan_out), jnp.float32, -bound, bound)
    return w, b


def init_cg_regressor_params(key):
    k1, k2, k3, k4, kr = jax.random.split(key, 5)
    w1, b1 = _init_linear(k1, HIDDEN, HIDDEN)
    w2, b2 = _init_linear(k2, HIDDEN, HIDDEN)
    w3, b3 = _init_linear(k3, HIDDEN, HIDDEN)
    w4, b4 = _init_linear(k4, HIDDEN, HIDDEN)
    wr, br = _init_linear(kr, HIDDEN + EXT_FEAT, 1)
    return (w1, b1, w2, b2, w3, b3, w4, b4, wr, br)


def fold_and_pack_params(head_params, stub_params):
    """One-time prep: fold affine chains and pack everything into one slab."""
    w1, b1, w2, b2, w3, b3, w4, b4, wr, br = head_params
    op_table, shape_proj, kernel_proj, enc_w = stub_params

    a1 = w1 @ w2                        # [H, H]   pre-ReLU folded weight
    c1 = b1 @ w2 + b2                   # [1, H]   pre-ReLU folded bias
    a2 = (w3 @ w4 @ wr).T               # [1, H]   post-ReLU folded weight
    c2 = (b3 @ w4 + b4) @ wr + br       # [1, 1]   post-ReLU folded bias

    slab = jnp.zeros((SLAB_ROWS, HIDDEN), jnp.float32)
    slab = slab.at[ROW_OP:ROW_OP + N_OP_TYPES].set(op_table)
    slab = slab.at[ROW_SHP:ROW_SHP + SHAPE_FEAT].set(shape_proj)
    slab = slab.at[ROW_KER:ROW_KER + KERNEL_FEAT].set(kernel_proj)
    slab = slab.at[ROW_BIAS].set(jnp.ones((HIDDEN,), jnp.float32))
    slab = slab.at[ROW_ENC:ROW_ENC + HIDDEN].set(enc_w)
    slab = slab.at[ROW_A1:ROW_A1 + HIDDEN].set(a1)
    slab = slab.at[ROW_C1].set(c1[0])
    slab = slab.at[ROW_A2].set(a2[0])
    slab = slab.at[ROW_C2].set(jnp.full((HIDDEN,), c2[0, 0]))
    return slab


# ---------------------------------------------------------------------------
# Pure-JAX stand-ins (reference path only — the kernel fuses all of these).
# ---------------------------------------------------------------------------
def embed_layer_stub(reg_inds, reg_shapes, w_inds, w_shapes, w_kernels, w_bias,
                     op_table, shape_proj, kernel_proj):
    emb = op_table[reg_inds] + op_table[w_inds]                     # [B, N, H]
    emb = emb + jnp.einsum('bns,sh->bnh', reg_shapes + w_shapes, shape_proj)
    emb = emb + jnp.einsum('bnk,kh->bnh', w_kernels, kernel_proj)
    emb = emb + w_bias[..., None]
    return emb


def encoder_stub(node_embedding, edge_adj, enc_w):
    msg = jnp.einsum('bmn,bnh->bmh', edge_adj, node_embedding)
    return jnp.tanh(node_embedding + jnp.einsum('bnh,hk->bnk', msg, enc_w))


def aggregator_stub(batch_embedding, batch_last_node_idx, index=None):
    B, N, _ = batch_embedding.shape
    node_ids = jnp.arange(N)[None, :]
    mask = (node_ids <= batch_last_node_idx[:, None]).astype(jnp.float32)
    summed = jnp.einsum('bnh,bn->bh', batch_embedding, mask)
    counts = jnp.maximum(mask.sum(axis=1, keepdims=True), 1.0)
    return summed / counts


# ---------------------------------------------------------------------------
if __name__ == "__main__":
    key = jax.random.PRNGKey(0)
    (k_head, k_table, k_sproj, k_kproj, k_enc,
     k_rshape, k_wshape, k_kern, k_bias, k_adj) = jax.random.split(key, 10)

    head_params = init_cg_regressor_params(k_head)

    op_table = jax.random.normal(k_table, (N_OP_TYPES, HIDDEN), jnp.float32) * 0.1
    shape_proj = jax.random.normal(k_sproj, (SHAPE_FEAT, HIDDEN), jnp.float32) * 0.1
    kernel_proj = jax.random.normal(k_kproj, (KERNEL_FEAT, HIDDEN), jnp.float32) * 0.1
    enc_w = jax.random.normal(k_enc, (HIDDEN, HIDDEN), jnp.float32) * 0.1
    stub_params = (op_table, shape_proj, kernel_proj, enc_w)

    packed_params = fold_and_pack_params(head_params, stub_params)

    regular_node_inds = jnp.arange(BATCH * NODES).reshape(BATCH, NODES) % N_OP_TYPES
    regular_node_shapes = jax.random.normal(k_rshape, (BATCH, NODES, SHAPE_FEAT), jnp.float32)
    weighted_node_inds = (jnp.arange(BATCH * NODES).reshape(BATCH, NODES) + 3) % N_OP_TYPES
    weighted_node_shapes = jax.random.normal(k_wshape, (BATCH, NODES, SHAPE_FEAT), jnp.float32)
    weighted_node_kernels = jax.random.normal(k_kern, (BATCH, NODES, KERNEL_FEAT), jnp.float32)
    weighted_node_bias = jax.random.normal(k_bias, (BATCH, NODES), jnp.float32)
    edge_adj = (jax.random.uniform(k_adj, (BATCH, NODES, NODES)) > 0.7).astype(jnp.float32)
    batch_last_node_idx = jnp.array([NODES - 1, NODES - 3], dtype=jnp.int32)

    inputs = (regular_node_inds, regular_node_shapes,
              weighted_node_inds, weighted_node_shapes,
              weighted_node_kernels, weighted_node_bias,
              edge_adj, batch_last_node_idx)

    out = cg_regressor_forward(inputs, packed_params)
    jax.block_until_ready(out)
    assert out.shape == (BATCH, 1), out.shape

    # pure-JAX reference (unfused, unfolded) for correctness
    ge = aggregator_stub(
        encoder_stub(
            embed_layer_stub(*inputs[:6], op_table, shape_proj, kernel_proj),
            edge_adj, enc_w),
        batch_last_node_idx)
    w1, b1, w2, b2, w3, b3, w4, b4, wr, br = head_params
    h = ge @ w1 + b1
    h = h @ w2 + b2
    h = jnp.maximum(h, 0.0)
    h = h @ w3 + b3
    h = h @ w4 + b4
    ref = h @ wr + br
    # folding / op-reordering changes rounding slightly -> modest tolerance
    assert jnp.allclose(out, ref, atol=1e-4, rtol=1e-4), (out, ref)

    print("KERNEL_OK")
</pallas_src>

<mosaic_0001>
module attributes {stable_mosaic.version = 11 : i64} {
  func.func @cg_regressor_fused_kernel(%arg0: memref<16x1xi32, #tpu.memory_space<vmem>>, %arg1: memref<16x1xi32, #tpu.memory_space<vmem>>, %arg2: memref<16x4xf32, #tpu.memory_space<vmem>>, %arg3: memref<16x4xf32, #tpu.memory_space<vmem>>, %arg4: memref<16x2xf32, #tpu.memory_space<vmem>>, %arg5: memref<16x1xf32, #tpu.memory_space<vmem>>, %arg6: memref<16x16xf32, #tpu.memory_space<vmem>>, %arg7: memref<2xi32, #tpu.memory_space<smem>>, %arg8: memref<96x32xf32, #tpu.memory_space<vmem>>, %arg9: memref<2x1xf32, #tpu.memory_space<vmem>>, %arg10: memref<16x23xf32, #tpu.memory_space<vmem>>) attributes {dimension_semantics = [], scalar_prefetch = 0 : i64, scratch_operands = 1 : i64, tpu.core_type = #tpu.core_type<tc>} {
    %0 = tpu.iota {dimensions = array<i32: 1>} : vector<16x16xi32>
    %c0 = arith.constant 0 : index
    %c0_0 = arith.constant 0 : index
    %1 = vector.load %arg0[%c0, %c0_0] : memref<16x1xi32, #tpu.memory_space<vmem>>, vector<16x1xi32>
    %2 = vector.broadcast %1 : vector<16x1xi32> to vector<16x16xi32>
    %3 = arith.cmpi eq, %2, %0 : vector<16x16xi32>
    %4 = arith.extui %3 : vector<16x16xi1> to vector<16x16xi32>
    %5 = arith.sitofp %4 : vector<16x16xi32> to vector<16x16xf32>
    %c0_1 = arith.constant 0 : index
    %c0_2 = arith.constant 0 : index
    %6 = vector.load %arg1[%c0_1, %c0_2] : memref<16x1xi32, #tpu.memory_space<vmem>>, vector<16x1xi32>
    %7 = vector.broadcast %6 : vector<16x1xi32> to vector<16x16xi32>
    %8 = arith.cmpi eq, %7, %0 : vector<16x16xi32>
    %9 = arith.extui %8 : vector<16x16xi1> to vector<16x16xi32>
    %10 = arith.sitofp %9 : vector<16x16xi32> to vector<16x16xf32>
    %11 = arith.addf %5, %10 : vector<16x16xf32>
    %c0_3 = arith.constant 0 : index
    %c0_4 = arith.constant 0 : index
    %12 = vector.load %arg10[%c0_3, %c0_4] : memref<16x23xf32, #tpu.memory_space<vmem>>, vector<16x16xf32>
    tpu.vector_store %arg10[%c0_3, %c0_4], %11 {strides = array<i32>} : memref<16x23xf32, #tpu.memory_space<vmem>>, vector<16x16xf32>,
    %c0_5 = arith.constant 0 : index
    %c0_6 = arith.constant 0 : index
    %13 = vector.load %arg2[%c0_5, %c0_6] : memref<16x4xf32, #tpu.memory_space<vmem>>, vector<16x4xf32>
    %c0_7 = arith.constant 0 : index
    %c0_8 = arith.constant 0 : index
    %14 = vector.load %arg3[%c0_7, %c0_8] : memref<16x4xf32, #tpu.memory_space<vmem>>, vector<16x4xf32>
    %15 = arith.addf %13, %14 : vector<16x4xf32>
    %c0_9 = arith.constant 0 : index
    %c16 = arith.constant 16 : index
    %16 = vector.load %arg10[%c0_9, %c16] : memref<16x23xf32, #tpu.memory_space<vmem>>, vector<16x4xf32>
    tpu.vector_store %arg10[%c0_9, %c16], %15 {strides = array<i32>} : memref<16x23xf32, #tpu.memory_space<vmem>>, vector<16x4xf32>,
    %c0_10 = arith.constant 0 : index
    %c0_11 = arith.constant 0 : index
    %17 = vector.load %arg4[%c0_10, %c0_11] : memref<16x2xf32, #tpu.memory_space<vmem>>, vector<16x2xf32>
    %c0_12 = arith.constant 0 : index
    %c20 = arith.constant 20 : index
    %18 = vector.load %arg10[%c0_12, %c20] : memref<16x23xf32, #tpu.memory_space<vmem>>, vector<16x2xf32>
    tpu.vector_store %arg10[%c0_12, %c20], %17 {strides = array<i32>} : memref<16x23xf32, #tpu.memory_space<vmem>>, vector<16x2xf32>,
    %c0_13 = arith.constant 0 : index
    %c0_14 = arith.constant 0 : index
    %19 = vector.load %arg5[%c0_13, %c0_14] : memref<16x1xf32, #tpu.memory_space<vmem>>, vector<16x1xf32>
    %c0_15 = arith.constant 0 : index
    %c22 = arith.constant 22 : index
    %20 = vector.load %arg10[%c0_15, %c22] : memref<16x23xf32, #tpu.memory_space<vmem>>, vector<16x1xf32>
    tpu.vector_store %arg10[%c0_15, %c22], %19 {strides = array<i32>} : memref<16x23xf32, #tpu.memory_space<vmem>>, vector<16x1xf32>,
    %c0_16 = arith.constant 0 : index
    %c0_17 = arith.constant 0 : index
    %21 = vector.load %arg10[%c0_16, %c0_17] : memref<16x23xf32, #tpu.memory_space<vmem>>, vector<16x23xf32>
    %c0_18 = arith.constant 0 : index
    %c0_19 = arith.constant 0 : index
    %22 = vector.load %arg8[%c0_18, %c0_19] : memref<96x32xf32, #tpu.memory_space<vmem>>, vector<23x32xf32>
    %cst = arith.constant dense<0.000000e+00> : vector<16x32xf32>
    %23 = tpu.matmul %21, %22, %cst {dimension_numbers = #tpu.dot_dimension_numbers<[1], [0], [0], [1], [0, 0, 1, 1], [], []>} : vector<16x23xf32>, vector<23x32xf32>, vector<16x32xf32> -> vector<16x32xf32>
    %c0_20 = arith.constant 0 : index
    %c0_21 = arith.constant 0 : index
    %24 = vector.load %arg6[%c0_20, %c0_21] : memref<16x16xf32, #tpu.memory_space<vmem>>, vector<16x16xf32>
    %cst_22 = arith.constant dense<0.000000e+00> : vector<16x32xf32>
    %25 = tpu.matmul %24, %23, %cst_22 {dimension_numbers = #tpu.dot_dimension_numbers<[1], [0], [0], [1], [0, 0, 1, 1], [], []>} : vector<16x16xf32>, vector<16x32xf32>, vector<16x32xf32> -> vector<16x32xf32>
    %c24 = arith.constant 24 : index
    %c0_23 = arith.constant 0 : index
    %26 = vector.load %arg8[%c24, %c0_23] : memref<96x32xf32, #tpu.memory_space<vmem>>, vector<32x32xf32>
    %cst_24 = arith.constant dense<0.000000e+00> : vector<16x32xf32>
    %27 = tpu.matmul %25, %26, %cst_24 {dimension_numbers = #tpu.dot_dimension_numbers<[1], [0], [0], [1], [0, 0, 1, 1], [], []>} : vector<16x32xf32>, vector<32x32xf32>, vector<16x32xf32> -> vector<16x32xf32>
    %28 = arith.addf %23, %27 : vector<16x32xf32>
    %29 = math.tanh %28 : vector<16x32xf32>
    %30 = tpu.iota {dimensions = array<i32: 0>} : vector<2x1xi32>
    %c0_i32 = arith.constant 0 : i32
    %31 = vector.broadcast %c0_i32 : i32 to vector<2x1xi32>
    %c0_i32_25 = arith.constant 0 : i32
    %32 = vector.broadcast %c0_i32_25 : i32 to vector<2x1xi32>
    %33 = arith.cmpi eq, %30, %32 : vector<2x1xi32>
    %c0_26 = arith.constant 0 : index
    %34 = memref.load %arg7[%c0_26] : memref<2xi32, #tpu.memory_space<smem>>
    %35 = vector.broadcast %34 : i32 to vector<2x1xi32>
    %36 = arith.select %33, %35, %31 : vector<2x1xi1>, vector<2x1xi32>
    %c1_i32 = arith.constant 1 : i32
    %37 = vector.broadcast %c1_i32 : i32 to vector<2x1xi32>
    %38 = arith.cmpi eq, %30, %37 : vector<2x1xi32>
    %c1 = arith.constant 1 : index
    %39 = memref.load %arg7[%c1] : memref<2xi32, #tpu.memory_space<smem>>
    %40 = vector.broadcast %39 : i32 to vector<2x1xi32>
    %41 = arith.select %38, %40, %36 : vector<2x1xi1>, vector<2x1xi32>
    %c7_i32 = arith.constant 7 : i32
    %42 = vector.broadcast %c7_i32 : i32 to vector<2x1xi32>
    %43 = arith.minsi %41, %42 : vector<2x1xi32>
    %44 = arith.sitofp %43 : vector<2x1xi32> to vector<2x1xf32>
    %cst_27 = arith.constant 1.000000e+00 : f32
    %45 = vector.broadcast %cst_27 : f32 to vector<2x1xf32>
    %46 = arith.addf %44, %45 : vector<2x1xf32>
    %cst_28 = arith.constant 1.000000e+00 : f32
    %47 = vector.broadcast %cst_28 : f32 to vector<2x1xf32>
    %48 = arith.maximumf %46, %47 : vector<2x1xf32>
    %cst_29 = arith.constant 1.000000e+00 : f32
    %49 = vector.broadcast %cst_29 : f32 to vector<2x1xf32>
    %50 = arith.divf %49, %48 : vector<2x1xf32>
    %51 = tpu.iota {dimensions = array<i32: 1>} : vector<2x16xi32>
    %52 = tpu.iota {dimensions = array<i32: 0>} : vector<2x16xi32>
    %c8_i32 = arith.constant 8 : i32
    %53 = vector.broadcast %c8_i32 : i32 to vector<2x16xi32>
    %54 = arith.muli %53, %52 : vector<2x16xi32>
    %55 = arith.cmpi sge, %51, %54 : vector<2x16xi32>
    %56 = arith.subi %51, %54 : vector<2x16xi32>
    %57 = vector.broadcast %43 : vector<2x1xi32> to vector<2x16xi32>
    %58 = arith.cmpi sle, %56, %57 : vector<2x16xi32>
    %59 = arith.andi %55, %58 : vector<2x16xi1>
    %60 = arith.extui %59 : vector<2x16xi1> to vector<2x16xi32>
    %61 = arith.sitofp %60 : vector<2x16xi32> to vector<2x16xf32>
    %62 = vector.broadcast %50 : vector<2x1xf32> to vector<2x16xf32>
    %63 = arith.mulf %61, %62 : vector<2x16xf32>
    %cst_30 = arith.constant dense<0.000000e+00> : vector<2x32xf32>
    %64 = tpu.matmul %63, %29, %cst_30 {dimension_numbers = #tpu.dot_dimension_numbers<[1], [0], [0], [1], [0, 0, 1, 1], [], []>} : vector<2x16xf32>, vector<16x32xf32>, vector<2x32xf32> -> vector<2x32xf32>
    %c56 = arith.constant 56 : index
    %c0_31 = arith.constant 0 : index
    %65 = vector.load %arg8[%c56, %c0_31] : memref<96x32xf32, #tpu.memory_space<vmem>>, vector<32x32xf32>
    %c88 = arith.constant 88 : index
    %c0_32 = arith.constant 0 : index
    %66 = vector.load %arg8[%c88, %c0_32] : memref<96x32xf32, #tpu.memory_space<vmem>>, vector<1x32xf32>
    %c89 = arith.constant 89 : index
    %c0_33 = arith.constant 0 : index
    %67 = vector.load %arg8[%c89, %c0_33] : memref<96x32xf32, #tpu.memory_space<vmem>>, vector<1x32xf32>
    %c90 = arith.constant 90 : index
    %c0_34 = arith.constant 0 : index
    %68 = vector.load %arg8[%c90, %c0_34] : memref<96x32xf32, #tpu.memory_space<vmem>>, vector<1x32xf32>
    %69 = vector.extract_strided_slice %68 {offsets = [0, 0], sizes = [1, 1], strides = [1, 1]} : vector<1x32xf32> to vector<1x1xf32>
    %cst_35 = arith.constant dense<0.000000e+00> : vector<2x32xf32>
    %70 = tpu.matmul %64, %65, %cst_35 {dimension_numbers = #tpu.dot_dimension_numbers<[1], [0], [0], [1], [0, 0, 1, 1], [], []>} : vector<2x32xf32>, vector<32x32xf32>, vector<2x32xf32> -> vector<2x32xf32>
    %71 = vector.broadcast %66 : vector<1x32xf32> to vector<2x32xf32>
    %72 = arith.addf %70, %71 : vector<2x32xf32>
    %cst_36 = arith.constant 0.000000e+00 : f32
    %73 = vector.broadcast %cst_36 : f32 to vector<2x32xf32>
    %74 = arith.maximumf %72, %73 : vector<2x32xf32>
    %75 = vector.broadcast %67 : vector<1x32xf32> to vector<2x32xf32>
    %76 = arith.mulf %74, %75 : vector<2x32xf32>
    %cst_37 = arith.constant dense<0.000000e+00> : vector<2xf32>
    %77 = vector.multi_reduction <add>, %76, %cst_37 [1] : vector<2x32xf32> to vector<2xf32>
    %78 = vector.shape_cast %77 : vector<2xf32> to vector<2x1xf32>
    %79 = vector.broadcast %69 : vector<1x1xf32> to vector<2x1xf32>
    %80 = arith.addf %78, %79 : vector<2x1xf32>
    %c0_38 = arith.constant 0 : index
    %c0_39 = arith.constant 0 : index
    %81 = vector.load %arg9[%c0_38, %c0_39] : memref<2x1xf32, #tpu.memory_space<vmem>>, vector<2x1xf32>
    tpu.vector_store %arg9[%c0_38, %c0_39], %80 {strides = array<i32>} : memref<2x1xf32, #tpu.memory_space<vmem>>, vector<2x1xf32>,
    return
  }
}

</mosaic_0001>

<llo_original>
// kernel: cg_regressor_forward.1
$region0: #{cg_regressor_forward.1}
  #allocation0 [shape = 'u32[]', space=smem, size = 0x4, offset = 0x4, fixed_abs, tag = 'smem constant byte address 0x4 - core index']
  #allocation1 [shape = 'u32[72,128]{1,0:T(1,128)}', space=vmem, size = 0x9000, scoped, tag = 'internal scratch']
  #allocation2 [shape = 'f32[16,23]{1,0:T(8,128)}', space=vmem, size = 0x2000, scoped, tag = 'scratch operand']
  %s0 = inlined_call_operand.vmem [shape: s32[16,1], index: 0, kind: input, shape index: {}]
  %s1 = inlined_call_operand.vmem [shape: s32[16,1], index: 1, kind: input, shape index: {}]
  %s2 = inlined_call_operand.vmem [shape: f32[16,4], index: 2, kind: input, shape index: {}]
  %s3 = inlined_call_operand.vmem [shape: f32[16,4], index: 3, kind: input, shape index: {}]
  %s4 = inlined_call_operand.vmem [shape: f32[16,2], index: 4, kind: input, shape index: {}]
  %s5 = inlined_call_operand.vmem [shape: f32[16,1], index: 5, kind: input, shape index: {}]
  %s6 = inlined_call_operand.vmem [shape: f32[16,16], index: 6, kind: input, shape index: {}]
  %s7 = inlined_call_operand.vmem [shape: s32[2], index: 7, kind: input, shape index: {}]
  %s8 = inlined_call_operand.vmem [shape: f32[96,32], index: 8, kind: input, shape index: {}]
  %s9 = inlined_call_operand.vmem [shape: f32[2,1], index: 9, kind: output, shape index: {}]
  %s10 = sld [smem:[#allocation0]]
  $region50: #{cg_regressor_forward.1} parent=0
    _
  %s12 = ssub.s32 1, %s10
  %s13 = scalar_select 0, %s12, %s10
  $region1: #{cg_regressor_forward.1} parent=0
    #allocation3 [shape = 'u8[512]{0}', space=smem, size = 0x200, scoped, tag = 'input window, operand 7, single buffered']
    #allocation4 [shape = 's32[1]{0}', space=sflag, size = 0x4, scoped, tag = 'scoped memory for cg_regressor_forward.1']
    %14 = vsyncpa [#allocation4], 0
    // Predicated region
    $region2: #{cg_regressor_forward.1} parent=1 // pred_check
      _
    $region3: #{cg_regressor_forward.1} parent=1 // pred_check_branch
      %16 = sbr.rel (0) target = $region5
    $region4: #{cg_regressor_forward.1} parent=1 // pred_region
      _
    $region5: #{cg_regressor_forward.1} parent=1 // pred_fallthru
      _
    // Predicated region
    $region6: #{cg_regressor_forward.1} parent=1 // pred_check
      _
    $region7: #{cg_regressor_forward.1} parent=1 // pred_check_branch
      %18 = sbr.rel (0) target = $region9
    $region8: #{cg_regressor_forward.1} parent=1 // pred_region
      _
    $region9: #{cg_regressor_forward.1} parent=1 // pred_fallthru
      _
    // Predicated region
    $region10: #{cg_regressor_forward.1} parent=1 // pred_check
      _
    $region11: #{cg_regressor_forward.1} parent=1 // pred_check_branch
      %20 = sbr.rel (0) target = $region13
    $region12: #{cg_regressor_forward.1} parent=1 // pred_region
      _
    $region13: #{cg_regressor_forward.1} parent=1 // pred_fallthru
      _
    // Predicated region
    $region14: #{cg_regressor_forward.1} parent=1 // pred_check
      _
    $region15: #{cg_regressor_forward.1} parent=1 // pred_check_branch
      %22 = sbr.rel (0) target = $region17
    $region16: #{cg_regressor_forward.1} parent=1 // pred_region
      _
    $region17: #{cg_regressor_forward.1} parent=1 // pred_fallthru
      _
    // Predicated region
    $region18: #{cg_regressor_forward.1} parent=1 // pred_check
      _
    $region19: #{cg_regressor_forward.1} parent=1 // pred_check_branch
      %24 = sbr.rel (0) target = $region21
    $region20: #{cg_regressor_forward.1} parent=1 // pred_region
      _
    $region21: #{cg_regressor_forward.1} parent=1 // pred_fallthru
      _
    // Predicated region
    $region22: #{cg_regressor_forward.1} parent=1 // pred_check
      _
    $region23: #{cg_regressor_forward.1} parent=1 // pred_check_branch
      %26 = sbr.rel (0) target = $region25
    $region24: #{cg_regressor_forward.1} parent=1 // pred_region
      _
    $region25: #{cg_regressor_forward.1} parent=1 // pred_fallthru
      _
    // Predicated region
    $region26: #{cg_regressor_forward.1} parent=1 // pred_check
      _
    $region27: #{cg_regressor_forward.1} parent=1 // pred_check_branch
      %28 = sbr.rel (0) target = $region29
    $region28: #{cg_regressor_forward.1} parent=1 // pred_region
      _
    $region29: #{cg_regressor_forward.1} parent=1 // pred_fallthru
      _
    // Predicated region
    $region30: #{cg_regressor_forward.1} parent=1 // pred_check
      _
    $region31: #{cg_regressor_forward.1} parent=1 // pred_check_branch
      %30 = sbr.rel (0) target = $region33
    $region32: #{cg_regressor_forward.1} parent=1 // pred_region
      %32 = vsyncadd [#allocation4], 0
      %s34 = sshll.u32 %s7, 4
      %s35 = int_to_ptr.vmem [resolvable:$true] %s34
      %37 = dma.vmem_to_smem %s35, 16, [#allocation3], [#allocation4]
    $region33: #{cg_regressor_forward.1} parent=1 // pred_fallthru
      _
    // Predicated region
    $region34: #{cg_regressor_forward.1} parent=1 // pred_check
      _
    $region35: #{cg_regressor_forward.1} parent=1 // pred_check_branch
      %39 = sbr.rel (0) target = $region37
    $region36: #{cg_regressor_forward.1} parent=1 // pred_region
      _
    $region37: #{cg_regressor_forward.1} parent=1 // pred_fallthru
      _
    // Predicated region
    $region38: #{cg_regressor_forward.1} parent=1 // pred_check
      _
    $region39: #{cg_regressor_forward.1} parent=1 // pred_check_branch
      %41 = sbr.rel (0) target = $region41
    $region40: #{cg_regressor_forward.1} parent=1 // pred_region
      %43 = dma.done [#allocation4], 16
    $region41: #{cg_regressor_forward.1} parent=1 // pred_fallthru
      _
    %44 = sfence
    %v45 = vlaneseq
    %v46 = vand.u32 %v45, 127
    %v47 = vld [vmem:[%s0] sm:$0xff]
    %v48 = vld [vmem:[%s0 + $0x8] sm:$0xff]
    %49 = vset.pattern.permute.xlu0 0
    %50 = vperm.xlu0 %49, %v47
    %v51 = vpop.permute.xlu0 %50
    %52 = vset.pattern.permute.xlu0 0
    %53 = vperm.xlu0 %52, %v48
    %v54 = vpop.permute.xlu0 %53
    %vm55 = vcmp.eq.s32.totalorder %v51, %v46
    %vm56 = vcmp.eq.s32.totalorder %v54, %v46
    %v57 = vsel %vm55, 1, 0
    %v58 = vsel %vm56, 1, 0
    %v59 = vcvt.s32.f32 %v57
    %v60 = vcvt.s32.f32 %v58
    %v61 = vld [vmem:[%s1] sm:$0xff]
    %v62 = vld [vmem:[%s1 + $0x8] sm:$0xff]
    %63 = vset.pattern.permute.xlu0 0
    %64 = vperm.xlu0 %63, %v61
    %v65 = vpop.permute.xlu0 %64
    %66 = vset.pattern.permute.xlu0 0
    %67 = vperm.xlu0 %66, %v62
    %v68 = vpop.permute.xlu0 %67
    %vm69 = vcmp.eq.s32.totalorder %v65, %v46
    %vm70 = vcmp.eq.s32.totalorder %v68, %v46
    %v71 = vsel %vm69, 1, 0
    %v72 = vsel %vm70, 1, 0
    %v73 = vcvt.s32.f32 %v71
    %v74 = vcvt.s32.f32 %v72
    %v75 = vadd.f32 %v59, %v73
    %v76 = vadd.f32 %v60, %v74
    %vm77 = vcmask 130048
    %78 = vst.msk [vmem:[#allocation2] sm:$0xff] %vm77, %v75
    %79 = vst.msk [vmem:[#allocation2 + $0x8] sm:$0xff] %vm77, %v76
    %v80 = vld [vmem:[%s2] sm:$0xff]
    %v81 = vld [vmem:[%s2 + $0x8] sm:$0xff]
    %v82 = vld [vmem:[%s3] sm:$0xff]
    %v83 = vld [vmem:[%s3 + $0x8] sm:$0xff]
    %v84 = vadd.f32 %v80, %v82
    %v85 = vadd.f32 %v81, %v83
    %88 = vrot.lane.b32.xlu0 %v84, 16
    %v89 = vpop.permute.xlu0 %88
    %90 = vrot.lane.b32.xlu0 %v85, 16
    %v91 = vpop.permute.xlu0 %90
    %vm94 = vcmask 162944
    %95 = vst.msk [vmem:[#allocation2] sm:$0xff] %vm94, %v89
    %96 = vst.msk [vmem:[#allocation2 + $0x8] sm:$0xff] %vm94, %v91
    %v97 = vld [vmem:[%s4] sm:$0xff]
    %v98 = vld [vmem:[%s4 + $0x8] sm:$0xff]
    %101 = vrot.lane.b32.xlu0 %v97, 20
    %v102 = vpop.permute.xlu0 %101
    %103 = vrot.lane.b32.xlu0 %v98, 20
    %v104 = vpop.permute.xlu0 %103
    %vm107 = vcmask 179360
    %108 = vst.msk [vmem:[#allocation2] sm:$0xff] %vm107, %v102
    %109 = vst.msk [vmem:[#allocation2 + $0x8] sm:$0xff] %vm107, %v104
    %v110 = vld [vmem:[%s5] sm:$0xff]
    %v111 = vld [vmem:[%s5 + $0x8] sm:$0xff]
    %114 = vrot.lane.b32.xlu0 %v110, 22
    %v115 = vpop.permute.xlu0 %114
    %116 = vrot.lane.b32.xlu0 %v111, 22
    %v117 = vpop.permute.xlu0 %116
    %vm120 = vcmask 187568
    %121 = vst.msk [vmem:[#allocation2] sm:$0xff] %vm120, %v115
    %122 = vst.msk [vmem:[#allocation2 + $0x8] sm:$0xff] %vm120, %v117
    %v123 = vld [vmem:[#allocation2] sm:$0xff]
    %v124 = vld [vmem:[#allocation2 + $0x8] sm:$0xff]
    %v125 = vld [vmem:[%s8] sm:$0xff]
    %v126 = vld [vmem:[%s8 + $0x8] sm:$0xff]
    %v127 = vld [vmem:[%s8 + $0x10] sm:$0x7f]
    %vm128 = vcmask 187392
    %v130 = vsel %vm128, %v123, 0
    %v133 = vsel %vm128, %v124, 0
    %vm135 = vcmask 1046528
    %v137 = vsel %vm135, %v127, 0
    %139 = vmatpush.msra.mxu0 0.0
    %140 = vmatpush.msra.mxu0 0.0
    %141 = vmatpush.msra.mxu0 0.0
    %142 = vmatpush.msra.mxu0 0.0
    %143 = vmatpush.msra.mxu0 0.0
    %144 = vmatpush.msra.mxu0 0.0
    %145 = vmatpush.msra.mxu0 0.0
    %146 = vmatpush.msra.mxu0 0.0
    %147 = vmatpush.msra.mxu0 0.0
    %148 = vmatpush.msra.mxu0 0.0
    %149 = vmatpush.msra.mxu0 0.0
    %150 = vmatpush.msra.mxu0 0.0
    %151 = vmatpush.msra.mxu0 0.0
    %152 = vmatpush.msra.mxu0 %v137
    %153 = vmatpush.msra.mxu0 %v126
    %154 = vmatpush.msra.mxu0 %v125
    %155 = vmatmul.f32.gmra.mxu0 %v130
    %v156 = vpop.f32.mrf.mxu0
    %v157 = vadd.f32 0.0, %v156
    %158 = vmatmul.f32.gmra.mxu0 %v133
    %v159 = vpop.f32.mrf.mxu0
    %v160 = vadd.f32 0.0, %v159
    %161 = vdwg.mxu0
    %v162 = vld [vmem:[%s6] sm:$0xff]
    %v163 = vld [vmem:[%s6 + $0x8] sm:$0xff]
    %v165 = vsel %vm77, %v162, 0
    %v168 = vsel %vm77, %v163, 0
    %170 = vmatpush.msra.mxu0 0.0
    %171 = vmatpush.msra.mxu0 0.0
    %172 = vmatpush.msra.mxu0 0.0
    %173 = vmatpush.msra.mxu0 0.0
    %174 = vmatpush.msra.mxu0 0.0
    %175 = vmatpush.msra.mxu0 0.0
    %176 = vmatpush.msra.mxu0 0.0
    %177 = vmatpush.msra.mxu0 0.0
    %178 = vmatpush.msra.mxu0 0.0
    %179 = vmatpush.msra.mxu0 0.0
    %180 = vmatpush.msra.mxu0 0.0
    %181 = vmatpush.msra.mxu0 0.0
    %182 = vmatpush.msra.mxu0 0.0
    %183 = vmatpush.msra.mxu0 0.0
    %184 = vmatpush.msra.mxu0 %v160
    %185 = vmatpush.msra.mxu0 %v157
    %186 = vmatmul.f32.gmra.mxu0 %v165
    %v187 = vpop.f32.mrf.mxu0
    %v188 = vadd.f32 0.0, %v187
    %189 = vmatmul.f32.gmra.mxu0 %v168
    %v190 = vpop.f32.mrf.mxu0
    %v191 = vadd.f32 0.0, %v190
    %192 = vdwg.mxu0
    %v193 = vld [vmem:[%s8 + $0x18] sm:$0xff]
    %v194 = vld [vmem:[%s8 + $0x20] sm:$0xff]
    %v195 = vld [vmem:[%s8 + $0x28] sm:$0xff]
    %v196 = vld [vmem:[%s8 + $0x30] sm:$0xff]
    %vm197 = vcmask 261120
    %v199 = vsel %vm197, %v188, 0
    %v202 = vsel %vm197, %v191, 0
    %204 = vmatpush.msra.mxu0 0.0
    %205 = vmatpush.msra.mxu0 0.0
    %206 = vmatpush.msra.mxu0 0.0
    %207 = vmatpush.msra.mxu0 0.0
    %208 = vmatpush.msra.mxu0 0.0
    %209 = vmatpush.msra.mxu0 0.0
    %210 = vmatpush.msra.mxu0 0.0
    %211 = vmatpush.msra.mxu0 0.0
    %212 = vmatpush.msra.mxu0 0.0
    %213 = vmatpush.msra.mxu0 0.0
    %214 = vmatpush.msra.mxu0 0.0
    %215 = vmatpush.msra.mxu0 0.0
    %216 = vmatpush.msra.mxu0 %v196
    %217 = vmatpush.msra.mxu0 %v195
    %218 = vmatpush.msra.mxu0 %v194
    %219 = vmatpush.msra.mxu0 %v193
    %220 = vmatmul.f32.gmra.mxu0 %v199
    %v221 = vpop.f32.mrf.mxu0
    %v222 = vadd.f32 0.0, %v221
    %223 = vmatmul.f32.gmra.mxu0 %v202
    %v224 = vpop.f32.mrf.mxu0
    %v225 = vadd.f32 0.0, %v224
    %226 = vdwg.mxu0
    %v227 = vadd.f32 %v157, %v222
    %v228 = vadd.f32 %v160, %v225
    %v229 = vtanh.pop %v227
    %v230 = vtanh.pop %v228
    %v231 = vlaneseq
    %v232 = vshrl.u32 %v231, 7
    %vm233 = vcmp.eq.s32.totalorder %v232, 0
    %s234 = sld [smem:[#allocation3]]
    %v235 = vstv %s234
    %v236 = vsel %vm233, %v235, 0
    %vm237 = vcmp.eq.s32.totalorder %v232, 1
    %s238 = sld [smem:[#allocation3 + $0x1]]
    %v239 = vstv %s238
    %v240 = vsel %vm237, %v239, %v236
    %vm241 = vcmp.lt.s32.totalorder %v240, 7
    %v242 = vsel %vm241, %v240, 7
    %v243 = vcvt.s32.f32 %v242
    %v244 = vadd.f32 %v243, 1.0
    %v245 = vmax.f32 %v244, 1.0
    %v246 = vrcp.pop %v245
    %v247 = vmul.f32 %v245, %v246
    %v248 = vsub.f32 1.0, %v247
    %v249 = vmul.f32 %v246, %v248
    %v250 = vadd.f32 %v246, %v249
    %vm251 = vweird.f32 %v245
    %vm252 = vweird.f32 %v246
    %vm253 = vmor %vm251, %vm252
    %v254 = vsel %vm253, %v246, %v250
    %v255 = vand.u32 2147483647, %v245
    %vm256 = vcmp.eq.f32.partialorder %v255, 8.507059e+37
    %v257 = vand.u32 %v245, 2147483648
    %v258 = vor.u32 1.1754944e-38, %v257
    %v259 = vsel %vm256, %v258, %v254
    %v260 = vmul.f32 1.0, %v259
    %v261 = vmul.u32 %v232, 8
    %vm262 = vcmp.ge.s32.totalorder %v46, %v261
    %v263 = vsub.s32 %v46, %v261
    %vm264 = vcmp.le.s32.totalorder %v263, %v242
    %vm265 = vmand %vm262, %vm264
    %v266 = vsel %vm265, 1, 0
    %v267 = vcvt.s32.f32 %v266
    %v268 = vmul.f32 %v267, %v260
    %v270 = vsel %vm77, %v268, 0
    %272 = vmatpush.msra.mxu0 0.0
    %273 = vmatpush.msra.mxu0 0.0
    %274 = vmatpush.msra.mxu0 0.0
    %275 = vmatpush.msra.mxu0 0.0
    %276 = vmatpush.msra.mxu0 0.0
    %277 = vmatpush.msra.mxu0 0.0
    %278 = vmatpush.msra.mxu0 0.0
    %279 = vmatpush.msra.mxu0 0.0
    %280 = vmatpush.msra.mxu0 0.0
    %281 = vmatpush.msra.mxu0 0.0
    %282 = vmatpush.msra.mxu0 0.0
    %283 = vmatpush.msra.mxu0 0.0
    %284 = vmatpush.msra.mxu0 0.0
    %285 = vmatpush.msra.mxu0 0.0
    %286 = vmatpush.msra.mxu0 %v230
    %287 = vmatpush.msra.mxu0 %v229
    %288 = vmatmul.f32.gmra.mxu0 %v270
    %v289 = vpop.f32.mrf.mxu0
    %v290 = vadd.f32 0.0, %v289
    %291 = vdwg.mxu0
    %v292 = vld [vmem:[%s8 + $0x38] sm:$0xff]
    %v293 = vld [vmem:[%s8 + $0x40] sm:$0xff]
    %v294 = vld [vmem:[%s8 + $0x48] sm:$0xff]
    %v295 = vld [vmem:[%s8 + $0x50] sm:$0xff]
    %v296 = vld [vmem:[%s8 + $0x58] sm:$0x1]
    %v297 = vld [vmem:[%s8 + $0x59] sm:$0x1]
    %v298 = vld [vmem:[%s8 + $0x5a] sm:$0x1]
    %v299 = vperm.slane %v296, 0
    %v301 = vsel %vm197, %v290, 0
    %303 = vmatpush.msra.mxu0 0.0
    %304 = vmatpush.msra.mxu0 0.0
    %305 = vmatpush.msra.mxu0 0.0
    %306 = vmatpush.msra.mxu0 0.0
    %307 = vmatpush.msra.mxu0 0.0
    %308 = vmatpush.msra.mxu0 0.0
    %309 = vmatpush.msra.mxu0 0.0
    %310 = vmatpush.msra.mxu0 0.0
    %311 = vmatpush.msra.mxu0 0.0
    %312 = vmatpush.msra.mxu0 0.0
    %313 = vmatpush.msra.mxu0 0.0
    %314 = vmatpush.msra.mxu0 0.0
    %315 = vmatpush.msra.mxu0 %v295
    %316 = vmatpush.msra.mxu0 %v294
    %317 = vmatpush.msra.mxu0 %v293
    %318 = vmatpush.msra.mxu0 %v292
    %319 = vmatmul.f32.gmra.mxu0 %v301
    %v320 = vpop.f32.mrf.mxu0
    %v321 = vadd.f32 %v299, %v320
    %322 = vdwg.mxu0
    %v323 = vmax.f32 %v321, 0.0
    %v324 = vperm.slane %v297, 0
    %v325 = vmul.f32 %v323, %v324
    %vm326 = vcmask 254976
    %v327 = vsel %vm326, %v325, 0.0
    %328 = vadd.xlane.f32.xlu0 %v327
    %v329 = vpop.xlane.xlu0 %328
    %v330 = vperm.slane %v298, 0
    %v331 = vadd.f32 %v329, %v330
    %vm332 = vcmask 1024
    %333 = vst.msk [vmem:[%s9] sm:$0x3] %vm332, %v331
    // Predicated region
    $region42: #{cg_regressor_forward.1} parent=1 // pred_check
      _
    $region43: #{cg_regressor_forward.1} parent=1 // pred_check_branch
      %335 = sbr.rel (0) target = $region45
    $region44: #{cg_regressor_forward.1} parent=1 // pred_region
      _
    $region45: #{cg_regressor_forward.1} parent=1 // pred_fallthru
      _
    // Predicated region
    $region46: #{cg_regressor_forward.1} parent=1 // pred_check
      _
    $region47: #{cg_regressor_forward.1} parent=1 // pred_check_branch
      %337 = sbr.rel (0) target = $region49
    $region48: #{cg_regressor_forward.1} parent=1 // pred_region
      _
    $region49: #{cg_regressor_forward.1} parent=1 // pred_fallthru
      _
    %338 = vsyncpa [#allocation4], 1

</llo_original>
